<compile_context>
chip_gen: v7x
topology: tpu7x:2x2x1
jax: 0.10.0
libtpu: 0.0.40
codegen_flags: <defaults>
</compile_context>

<pallas_src>
import jax
import jax.numpy as jnp
from jax.experimental import pallas as pl
from jax.experimental.pallas import tpu as pltpu

# ----- problem sizes (small, consistent with the module's conventions) -------
M = 3      # number of models in the bag
S = 4      # number of sources
C = 2      # audio channels
B = 2      # batch
T = 256    # time samples


def bag_kernel(x_ref, w_ref, o_ref):
    # Per grid step (one batch element, one time tile):
    #   x_ref : (C, tT)       input tile, native channel-major layout
    #   w_ref : (S*C, C)      pre-combined weight matrix (models + bag weights
    #                         + 1/total already folded), resident across steps
    #   o_ref : (S*C, tT)     output tile (bf16 store, f32 accumulation)
    x = x_ref[...].astype(jnp.float32)               # (C, tT)
    w = w_ref[...]                                   # (S*C, C) f32
    # K = C = 2 with only S*C = 8 output rows: a degenerate MXU matmul would
    # waste the systolic array; do it as broadcast FMAs on the VPU (the (.,1)
    # lane-broadcast of w lands on the XLU slot, which has slack).
    acc = w[:, 0:1] * x[0:1, :]                      # (S*C, tT)
    for c in range(1, C):                            # static unroll, C is tiny
        acc = acc + w[:, c:c + 1] * x[c:c + 1, :]
    o_ref[...] = acc.astype(o_ref.dtype)


def bag_of_models(x, model_w, bag_w, out_dtype=jnp.bfloat16):
    """x: (B, C, T); model_w: (M, S*C, C); bag_w: (M, S)
    returns (B, S, C, T) — per-source weighted average of model outputs."""
    Bx, Cx, Tx = x.shape
    Mx, Ox, _ = model_w.shape            # Ox = S*C
    Sx = bag_w.shape[1]
    assert Ox == Sx * Cx and bag_w.shape[0] == Mx

    # Algebraic fold (valid only because the synthetic "models" are linear):
    #   sum_k bag_w[k][s] * (model_w[k] @ x) / sum_k bag_w[k][s]
    #     = (sum_k mw[k] * model_w[k] / tot) @ x  =  W_comb @ x
    mw = jnp.repeat(bag_w.astype(jnp.float32), Cx, axis=1)              # (M, S*C)
    tot = jnp.sum(mw, axis=0)                                           # (S*C,)
    # Upstream demucs guarantees per-source weights don't sum to zero; guard
    # anyway so a degenerate bag can't emit NaN/Inf.
    tot = jnp.where(tot > 0.0, tot, 1.0)
    w_comb = jnp.einsum('mo,moc->oc', mw, model_w.astype(jnp.float32))  # (S*C, C)
    w_comb = w_comb / tot[:, None]

    # Time tile: lane-dense (multiple of 128) and as large as sensible.  At
    # the toy size tT == T (one tile); at real Demucs lengths cap at 1024
    # columns, which double-buffers comfortably even inside v7x's 64 MiB VMEM.
    if Tx <= 1024:
        tT = Tx
    else:
        tT = 1024
    assert Tx % tT == 0 and (tT % 128 == 0 or tT == Tx)
    nT = Tx // tT

    out = pl.pallas_call(
        bag_kernel,
        out_shape=jax.ShapeDtypeStruct((Bx, Ox, Tx), out_dtype),
        grid=(Bx, nT),
        in_specs=[
            # x: native layout, leading batch dim squeezed out of the kernel.
            pl.BlockSpec((None, Cx, tT), lambda b, t: (b, 0, t)),
            # combined weights: constant index_map -> stays resident in VMEM.
            pl.BlockSpec((Ox, Cx), lambda b, t: (0, 0)),
        ],
        out_specs=pl.BlockSpec((None, Ox, tT), lambda b, t: (b, 0, t)),
        compiler_params=pltpu.CompilerParams(
            # Both axes are independent: lets Mosaic shard across the two
            # TensorCores on v7x (no effect on v5e/v6e) and pipeline the DMAs.
            dimension_semantics=("parallel", "parallel")),
    )(x, w_comb)

    # (B, S*C, T) -> (B, S, C, T) is a pure reshape: free, no transpose pass.
    return out.reshape(Bx, Sx, Cx, Tx)


def reference(x, model_w, bag_w):
    """Pure-JAX f32 reference of the BagOfModels combination."""
    acc = jnp.zeros((B, S, C, T), jnp.float32)
    tot = jnp.zeros((S,), jnp.float32)
    for k in range(M):
        y = jnp.einsum('oc,bct->bot', model_w[k], x).reshape(B, S, C, T)
        acc = acc + bag_w[k][None, :, None, None] * y
        tot = tot + bag_w[k]
    return acc / tot[None, :, None, None]


if __name__ == "__main__":
    key = jax.random.PRNGKey(0)
    kx, kw, kb = jax.random.split(key, 3)

    # deterministic inputs / parameters
    x = jax.random.normal(kx, (B, C, T), dtype=jnp.float32)
    model_w = jax.random.normal(kw, (M, S * C, C), dtype=jnp.float32) * 0.1
    # bag weights: positive, per (model, source) — analogous to `weights` arg
    bag_w = jax.random.uniform(kb, (M, S), dtype=jnp.float32, minval=0.5, maxval=1.5)

    out = jax.block_until_ready(bag_of_models(x, model_w, bag_w))
    ref = reference(x, model_w, bag_w)

    assert out.shape == (B, S, C, T)
    assert out.dtype == jnp.bfloat16
    # bf16 stores: compare in f32 with a tolerance suited to bf16 precision.
    assert jnp.allclose(out.astype(jnp.float32), ref, rtol=2e-2, atol=2e-2)
    print("KERNEL_OK")
</pallas_src>

<mosaic_0001>
module attributes {stable_mosaic.version = 11 : i64} {
  func.func @bag_kernel(%arg0: i32, %arg1: i32, %arg2: memref<1x2x256xf32, #tpu.memory_space<vmem>>, %arg3: memref<8x2xf32, #tpu.memory_space<vmem>>, %arg4: memref<1x8x256xbf16, #tpu.memory_space<vmem>>) attributes {dimension_semantics = [#tpu.dimension_semantics<parallel>, #tpu.dimension_semantics<parallel>], iteration_bounds = array<i64: 2, 1>, scalar_prefetch = 0 : i64, scratch_operands = 0 : i64, tpu.core_type = #tpu.core_type<tc>, window_params = [{transform_indices = @transform_0, window_bounds = array<i64: 1, 2, 256>}, {pipeline_mode = #tpu.pipeline_mode<synchronous>, transform_indices = @transform_1, window_bounds = array<i64: 8, 2>}, {transform_indices = @transform_2, window_bounds = array<i64: 1, 8, 256>}]} {
    %c0 = arith.constant 0 : index
    %c0_0 = arith.constant 0 : index
    %c0_1 = arith.constant 0 : index
    %0 = vector.load %arg2[%c0, %c0_0, %c0_1] : memref<1x2x256xf32, #tpu.memory_space<vmem>>, vector<1x2x256xf32>
    %1 = vector.shape_cast %0 : vector<1x2x256xf32> to vector<2x256xf32>
    %c0_2 = arith.constant 0 : index
    %c0_3 = arith.constant 0 : index
    %2 = vector.load %arg3[%c0_2, %c0_3] : memref<8x2xf32, #tpu.memory_space<vmem>>, vector<8x2xf32>
    %3 = vector.extract_strided_slice %2 {offsets = [0, 0], sizes = [8, 1], strides = [1, 1]} : vector<8x2xf32> to vector<8x1xf32>
    %4 = vector.extract_strided_slice %1 {offsets = [0, 0], sizes = [1, 256], strides = [1, 1]} : vector<2x256xf32> to vector<1x256xf32>
    %5 = vector.broadcast %3 : vector<8x1xf32> to vector<8x256xf32>
    %6 = vector.broadcast %4 : vector<1x256xf32> to vector<8x256xf32>
    %7 = arith.mulf %5, %6 : vector<8x256xf32>
    %8 = vector.extract_strided_slice %2 {offsets = [0, 1], sizes = [8, 1], strides = [1, 1]} : vector<8x2xf32> to vector<8x1xf32>
    %9 = vector.extract_strided_slice %1 {offsets = [1, 0], sizes = [1, 256], strides = [1, 1]} : vector<2x256xf32> to vector<1x256xf32>
    %10 = vector.broadcast %8 : vector<8x1xf32> to vector<8x256xf32>
    %11 = vector.broadcast %9 : vector<1x256xf32> to vector<8x256xf32>
    %12 = arith.mulf %10, %11 : vector<8x256xf32>
    %13 = arith.addf %7, %12 : vector<8x256xf32>
    %14 = arith.truncf %13 : vector<8x256xf32> to vector<8x256xbf16>
    %c0_4 = arith.constant 0 : index
    %c0_5 = arith.constant 0 : index
    %c0_6 = arith.constant 0 : index
    %15 = vector.load %arg4[%c0_4, %c0_5, %c0_6] : memref<1x8x256xbf16, #tpu.memory_space<vmem>>, vector<1x8x256xbf16>
    %16 = vector.shape_cast %15 : vector<1x8x256xbf16> to vector<8x256xbf16>
    %17 = vector.shape_cast %14 : vector<8x256xbf16> to vector<1x8x256xbf16>
    tpu.vector_store %arg4[%c0_4, %c0_5, %c0_6], %17 {strides = array<i32>} : memref<1x8x256xbf16, #tpu.memory_space<vmem>>, vector<1x8x256xbf16>,
    return
  }
  func.func @transform_0(%arg0: i32, %arg1: i32) -> (i32, i32, i32) {
    %c0_i32 = arith.constant 0 : i32
    %c0_i32_0 = arith.constant 0 : i32
    return %arg0, %c0_i32, %arg1 : i32, i32, i32
  }
  func.func @transform_1(%arg0: i32, %arg1: i32) -> (i32, i32) {
    %c0_i32 = arith.constant 0 : i32
    %c0_i32_0 = arith.constant 0 : i32
    %c0_i32_1 = arith.constant 0 : i32
    return %c0_i32, %c0_i32_0 : i32, i32
  }
  func.func @transform_2(%arg0: i32, %arg1: i32) -> (i32, i32, i32) {
    %c0_i32 = arith.constant 0 : i32
    %c0_i32_0 = arith.constant 0 : i32
    return %arg0, %c0_i32, %arg1 : i32, i32, i32
  }
}

</mosaic_0001>

<llo_original>
// kernel: tpu_custom_call.1
$region0: #{tpu_custom_call.1}
  #allocation0 [shape = 'u32[]', space=smem, size = 0x4, offset = 0x4, fixed_abs, tag = 'smem constant byte address 0x4 - core index']
  #allocation1 [shape = 'u32[144,128]{1,0:T(1,128)}', space=vmem, size = 0x12000, scoped, tag = 'internal scratch']
  %s0 = inlined_call_operand.vmem [shape: f32[2,2,256], index: 0, kind: input, shape index: {}]
  %s1 = inlined_call_operand.vmem [shape: f32[8,2], index: 1, kind: input, shape index: {}]
  %s2 = inlined_call_operand.hbm [shape: bf16[2,8,256], index: 2, kind: output, shape index: {}]
  %s3 = sld [smem:[#allocation0]]
  $region41: #{tpu_custom_call.1} parent=0
    _
  %s5 = ssub.s32 1, %s3
  %s6 = scalar_select 0, %s5, %s3
  $region1: #{tpu_custom_call.1} parent=0
    #allocation2 [shape = 'u8[8192]{0}', space=vmem, size = 0x2000, scoped, tag = 'output window, operand 0']
    #allocation3 [shape = 's32[2]{0}', space=sflag, size = 0x8, scoped, tag = 'scoped memory for tpu_custom_call.1']
    %7 = vsyncpa [#allocation3], 0
    %s8 = scalar_lea.sflag [#allocation3], 1
    %9 = vsyncpa %s8, 0
    loop: start=0, step=1, limit=4
    $region2: #{tpu_custom_call.1} parent=1 // loop_pre_header
      _
    $region3: #{tpu_custom_call.1} parent=1 // loop_header
      %s11 = sphi 0, %s15
      %p12 = scmp.ge.s32.totalorder %s11, 4
      %s18 = sphi 0, %s30
      %s19 = sphi 0, %s26
      %s20 = sphi 0, %s18
      %s21 = sphi 0, %s19
      %s22 = sphi 0, %s20
      %s23 = sphi 0, %s21
      %s35 = sphi 0, %s37
      %s38 = sphi 0, %s35
      %s39 = sphi 0, %s38
      %s55 = sphi 0, %s39
      %s59 = sphi 0, %s59
      %s61 = sphi 0, %s59
      %s62 = sphi 0, %s61
      %s76 = sphi 0, %s62
      %s84 = sphi 0, %s86
      %s87 = sphi 0, %s84
      %s88 = sphi 0, %s87
      %s104 = sphi 0, %s88
    $region4: #{tpu_custom_call.1} parent=1 // loop_header_branch
      %14 = sbr.rel (%p12) target = $region8
    $region5: #{tpu_custom_call.1} parent=1 // loop_body
      %s16 = ssub.s32 %s11, 1
      %s17 = ssub.s32 %s11, 2
      %s24 = sadd.s32 1, %s19
      %p25 = scmp.ge.s32.totalorder %s24, 1
      %s26 = scalar_select %p25, 0, %s24
      %s27 = sadd.s32 1, %s18
      %s28 = scalar_select %p25, %s27, %s18
      %p29 = scmp.ge.s32.totalorder %s28, 2
      %s30 = scalar_select %p29, 0, %s28
      %s31 = ssub.s32 %s18, %s30
      %s32 = ssub.s32 %s19, %s26
      %s33 = sor.u32 %s31, %s32
      %p34 = scmp.eq.s32.totalorder %s33, 0
      %s36 = sadd.s32 %s35, 1
      %s37 = scalar_select %p34, %s35, %s36
      %p40 = pneg %p34
      %p41 = scmp.eq.s32.totalorder %s11, 1
      %p42 = por %p40, %p41
      %p43 = scmp.ne.s32.totalorder %s35, %s38
      %p44 = scmp.eq.s32.totalorder %s11, 0
      %p45 = por %p43, %p44
      %p46 = scmp.ne.s32.totalorder %s35, %s38
      %p47 = scmp.eq.s32.totalorder %s16, 1
      %p48 = por %p46, %p47
      %p49 = scmp.ne.s32.totalorder %s38, %s39
      %p50 = scmp.eq.s32.totalorder %s16, 0
      %p51 = por %p49, %p50
      %p52 = scmp.ne.s32.totalorder %s38, %s39
      %p53 = scmp.eq.s32.totalorder %s17, 1
      %p54 = por %p52, %p53
      %p56 = scmp.ne.s32.totalorder %s39, %s55
      %p57 = scmp.eq.s32.totalorder %s17, 0
      %p58 = por %p56, %p57
      %s60 = sadd.s32 %s59, 1
      %p63 = scmp.eq.s32.totalorder %s11, 1
      %p64 = scmp.ne.s32.totalorder %s59, %s61
      %p65 = scmp.eq.s32.totalorder %s11, 0
      %p66 = por %p64, %p65
      %p67 = scmp.ne.s32.totalorder %s59, %s61
      %p68 = scmp.eq.s32.totalorder %s16, 1
      %p69 = por %p67, %p68
      %p70 = scmp.ne.s32.totalorder %s61, %s62
      %p71 = scmp.eq.s32.totalorder %s16, 0
      %p72 = por %p70, %p71
      %p73 = scmp.ne.s32.totalorder %s61, %s62
      %p74 = scmp.eq.s32.totalorder %s17, 1
      %p75 = por %p73, %p74
      %p77 = scmp.ne.s32.totalorder %s62, %s76
      %p78 = scmp.eq.s32.totalorder %s17, 0
      %p79 = por %p77, %p78
      %s80 = ssub.s32 %s18, %s30
      %s81 = ssub.s32 %s19, %s26
      %s82 = sor.u32 %s80, %s81
      %p83 = scmp.eq.s32.totalorder %s82, 0
      %s85 = sadd.s32 %s84, 1
      %s86 = scalar_select %p83, %s84, %s85
      %p89 = pneg %p83
      %p90 = scmp.eq.s32.totalorder %s11, 1
      %p91 = por %p89, %p90
      %p92 = scmp.ne.s32.totalorder %s84, %s87
      %p93 = scmp.eq.s32.totalorder %s11, 0
      %p94 = por %p92, %p93
      %p95 = scmp.ne.s32.totalorder %s84, %s87
      %p96 = scmp.eq.s32.totalorder %s16, 1
      %p97 = por %p95, %p96
      %p98 = scmp.ne.s32.totalorder %s87, %s88
      %p99 = scmp.eq.s32.totalorder %s16, 0
      %p100 = por %p98, %p99
      %p101 = scmp.ne.s32.totalorder %s87, %s88
      %p102 = scmp.eq.s32.totalorder %s17, 1
      %p103 = por %p101, %p102
      %p105 = scmp.ne.s32.totalorder %s88, %s104
      %p106 = scmp.eq.s32.totalorder %s17, 0
      %p107 = por %p105, %p106
      %p108 = scmp.le.s32.totalorder 1, %s11
      %p109 = scmp.lt.s32.totalorder %s11, 3
      %p110 = pnand %p108, %p109
      %p111 = pneg %p110
      // Predicated region
      $region9: #{tpu_custom_call.1} parent=5 // pred_check
        _
      $region10: #{tpu_custom_call.1} parent=5 // pred_check_branch
        %113 = sbr.rel (%p110) target = $region12
      $region11: #{tpu_custom_call.1} parent=5 // pred_region
        %s114 = ssub.s32 %s11, 1
        // Predicated region
        $region13: #{tpu_custom_call.1} parent=11 // pred_check
          %p115 = pneg %p72
        $region14: #{tpu_custom_call.1} parent=11 // pred_check_branch
          %117 = sbr.rel (%p115) target = $region16
        $region15: #{tpu_custom_call.1} parent=11 // pred_region
          _
        $region16: #{tpu_custom_call.1} parent=11 // pred_fallthru
          _
      $region12: #{tpu_custom_call.1} parent=5 // pred_fallthru
        _
      %p118 = scmp.lt.s32.totalorder %s11, 2
      // Predicated region
      $region17: #{tpu_custom_call.1} parent=5 // pred_check
        %p119 = pneg %p118
      $region18: #{tpu_custom_call.1} parent=5 // pred_check_branch
        %121 = sbr.rel (%p119) target = $region20
      $region19: #{tpu_custom_call.1} parent=5 // pred_region
        // Predicated region
        $region21: #{tpu_custom_call.1} parent=19 // pred_check
          %p122 = pneg %p45
        $region22: #{tpu_custom_call.1} parent=19 // pred_check_branch
          %124 = sbr.rel (%p122) target = $region24
        $region23: #{tpu_custom_call.1} parent=19 // pred_region
          %s125 = smul.u32 2, %s19
          %p126 = scmp.lt.s32.totalorder %s18, 1
          %s127 = scalar_select %p126, %s18, 1
          %p128 = scmp.lt.s32.totalorder %s125, 1
          %s129 = scalar_select %p128, %s125, 1
          %s130 = smul.addr %s127, 2
          %s131 = sadd.s32 %s129, %s130
          %s132 = smul.addr %s131, 2
          %s133 = scalar_lea.vmem %s0, %s132
          %s134 = smul.u32 2, %s19
        $region24: #{tpu_custom_call.1} parent=19 // pred_fallthru
          _
      $region20: #{tpu_custom_call.1} parent=5 // pred_fallthru
        _
      %p135 = scmp.le.s32.totalorder 1, %s11
      %p136 = scmp.lt.s32.totalorder %s11, 3
      %p137 = pnand %p135, %p136
      %p138 = pneg %p137
      // Predicated region
      $region25: #{tpu_custom_call.1} parent=5 // pred_check
        _
      $region26: #{tpu_custom_call.1} parent=5 // pred_check_branch
        %140 = sbr.rel (%p137) target = $region28
      $region27: #{tpu_custom_call.1} parent=5 // pred_region
        %s141 = ssub.s32 %s11, 1
        %s142 = smul.u32 2, %s21
        %p143 = scmp.lt.s32.totalorder %s20, 1
        %s144 = scalar_select %p143, %s20, 1
        %p145 = scmp.lt.s32.totalorder %s142, 1
        %s146 = scalar_select %p145, %s142, 1
        %s147 = smul.addr %s144, 2
        %s148 = sadd.s32 %s146, %s147
        %s149 = smul.addr %s148, 2
        %s150 = scalar_lea.vmem %s0, %s149
        %p151 = pneg %p51
        %p152 = pneg %p48
        %p153 = pneg %p72
        %p154 = pneg %p69
        %p155 = pneg %p100
        %p156 = pneg %p97
        %s157 = sand.u32 %s87, 1
        %s158 = scalar_lea.sflag [#allocation3], %s157
        %s159 = sand.u32 %s87, 1
        %s160 = smul.addr %s159, 8
        %s161 = scalar_lea.vmem [#allocation2], %s160
        %s162 = smul.u32 2, %s21
        %p163 = scmp.lt.s32.totalorder %s20, 1
        %s164 = scalar_select %p163, %s20, 1
        %p165 = scmp.lt.s32.totalorder %s162, 1
        %s166 = scalar_select %p165, %s162, 1
        %s167 = smul.addr %s164, 2
        %s168 = sadd.s32 %s166, %s167
        %s169 = smul.addr %s168, 2
        %s170 = scalar_lea.vmem %s0, %s169
        %s171 = smul.u32 2, %s21
        %s172 = smul.u32 2, %s21
        %v173 = vld [vmem:[%s170] sm:$0xf]
        %v174 = vld [vmem:[%s1] sm:$0xff]
        %176 = vset.pattern.permute.xlu0 0
        %177 = vperm.xlu0 %176, %v174
        %v178 = vpop.permute.xlu0 %177
        %v181 = vlaneseq
        %v182 = vshrl.u32 %v181, 7
        %v183 = vsub.s32 0, %v182
        %v184 = vrot.slane %v173, %v183
        %v185 = vlaneseq
        %v186 = vshrl.u32 %v185, 7
        %v187 = vsub.s32 2, %v186
        %v188 = vrot.slane %v173, %v187
        %v191 = vlaneseq
        %v192 = vshrl.u32 %v191, 7
        %v193 = vsub.s32 0, %v192
        %v194 = vrot.slane %v184, %v193
        %v195 = vlaneseq
        %v196 = vshrl.u32 %v195, 7
        %v197 = vsub.s32 0, %v196
        %v198 = vrot.slane %v188, %v197
        %v199 = vmul.f32 %v178, %v194
        %v200 = vmul.f32 %v178, %v198
        %201 = vset.pattern.permute.xlu0 1
        %202 = vperm.xlu0 %201, %v174
        %v203 = vpop.permute.xlu0 %202
        %v205 = vlaneseq
        %v206 = vshrl.u32 %v205, 7
        %v207 = vsub.s32 1, %v206
        %v208 = vrot.slane %v173, %v207
        %v209 = vlaneseq
        %v210 = vshrl.u32 %v209, 7
        %v211 = vsub.s32 3, %v210
        %v212 = vrot.slane %v173, %v211
        %v215 = vlaneseq
        %v216 = vshrl.u32 %v215, 7
        %v217 = vsub.s32 1, %v216
        %v218 = vrot.slane %v208, %v217
        %v219 = vlaneseq
        %v220 = vshrl.u32 %v219, 7
        %v221 = vsub.s32 1, %v220
        %v222 = vrot.slane %v212, %v221
        %v223 = vmul.f32 %v203, %v218
        %v224 = vmul.f32 %v203, %v222
        %v225 = vadd.f32 %v199, %v223
        %v226 = vadd.f32 %v200, %v224
        %v227 = vpack.c.bf16 %v225, %v225
        %v228 = vpack.c.bf16 %v226, %v226
        %v231 = vunpack.c.l.b16 %v227
        %v232 = vunpack.c.l.b16 %v228
        %v233 = vpack.c.b16 %v232, %v231
        %235 = vst [vmem:[%s161] sm:$0xff] %v233
        %s236 = sand.u32 %s87, 1
        %s237 = scalar_lea.sflag [#allocation3], %s236
        %s238 = sand.u32 %s87, 1
        %s239 = smul.addr %s238, 8
        %s240 = scalar_lea.vmem [#allocation2], %s239
        // Predicated region
        $region29: #{tpu_custom_call.1} parent=27 // pred_check
          %p241 = pneg %p97
        $region30: #{tpu_custom_call.1} parent=27 // pred_check_branch
          %243 = sbr.rel (%p241) target = $region32
        $region31: #{tpu_custom_call.1} parent=27 // pred_region
          %s244 = smul.u32 2, %s21
          %s246 = ssub.s32 128, 128
          %247 = vsyncadd %s237, %s246
          %s248 = smul.addr %s20, 2
          %s249 = sadd.s32 %s244, %s248
          %s250 = smul.addr %s249, 64
          %s251 = scalar_lea.hbm %s2, %s250
          %s253 = sshll.u32 %s240, 4
          %s254 = int_to_ptr.vmem [resolvable:$true] %s253
          %256 = dma.vmem_to_hbm [thread:$0]  %s254, 128, %s251, %s237
        $region32: #{tpu_custom_call.1} parent=27 // pred_fallthru
          _
      $region28: #{tpu_custom_call.1} parent=5 // pred_fallthru
        _
      %p257 = scmp.le.s32.totalorder 2, %s11
      // Predicated region
      $region33: #{tpu_custom_call.1} parent=5 // pred_check
        %p258 = pneg %p257
      $region34: #{tpu_custom_call.1} parent=5 // pred_check_branch
        %260 = sbr.rel (%p258) target = $region36
      $region35: #{tpu_custom_call.1} parent=5 // pred_region
        %s261 = ssub.s32 %s11, 2
        // Predicated region
        $region37: #{tpu_custom_call.1} parent=35 // pred_check
          %p262 = pneg %p103
        $region38: #{tpu_custom_call.1} parent=35 // pred_check_branch
          %264 = sbr.rel (%p262) target = $region40
        $region39: #{tpu_custom_call.1} parent=35 // pred_region
          %s265 = sand.u32 %s88, 1
          %s266 = scalar_lea.sflag [#allocation3], %s265
          %s267 = sand.u32 %s88, 1
          %s268 = smul.addr %s267, 8
          %s269 = scalar_lea.vmem [#allocation2], %s268
          %270 = dma.done %s266, 128
        $region40: #{tpu_custom_call.1} parent=35 // pred_fallthru
          _
      $region36: #{tpu_custom_call.1} parent=5 // pred_fallthru
        _
    $region6: #{tpu_custom_call.1} parent=1 // loop_footer
      %s15 = sadd.s32 1, %s11
    $region7: #{tpu_custom_call.1} parent=1 // loop_footer_branch
      %10 = sbr.rel target = $region3
    $region8: #{tpu_custom_call.1} parent=1 // loop_exit
      _
    %271 = vsyncpa [#allocation3], 1
    %s272 = scalar_lea.sflag [#allocation3], 1
    %273 = vsyncpa %s272, 1

</llo_original>
